<compile_context>
chip_gen: v5e
topology: v5e:2x2
jax: 0.10.0
libtpu: 0.0.40
codegen_flags: <defaults>
</compile_context>

<pallas_src>
import functools
import math

import jax
import jax.numpy as jnp
from jax import lax
from jax.experimental import pallas as pl
from jax.experimental.pallas import tpu as pltpu


# ---------------------------------------------------------------------------
# Kernel
# ---------------------------------------------------------------------------
def channel_attention_kernel(x_ref, weff_ref, beff_ref, o_ref,
                             sum_acc, max_acc, *,
                             hw_true, n_chunks_main, n_full_last, rem_last,
                             hw_steps, unroll):
    """grid = (batch_blocks, hw_steps); spatial reduction axis is last."""
    k = pl.program_id(1)
    acc_shape = sum_acc.shape                              # (Bt, C, 128)

    @pl.when(k == 0)
    def _init():
        sum_acc[...] = jnp.zeros_like(sum_acc)
        max_acc[...] = jnp.full_like(max_acc, -jnp.inf)

    def chunk_body(j, carry):
        psum, pmax = carry
        off = pl.multiple_of(j * 128, 128)
        c = x_ref[:, :, pl.ds(off, 128)].astype(jnp.float32)
        return psum + c, jnp.maximum(pmax, c)

    def reduce_chunks(n):
        init = (jnp.zeros(acc_shape, jnp.float32),
                jnp.full(acc_shape, -jnp.inf, jnp.float32))
        if n == 0:
            return init
        if n <= 8:                                         # small: full unroll
            carry = init
            for j in range(n):
                carry = chunk_body(j, carry)
            return carry
        return lax.fori_loop(0, n, chunk_body, init, unroll=unroll)

    def commit(psum, pmax):
        # One scratch read-modify-write per grid step, not per 128-lane chunk.
        sum_acc[...] += psum
        max_acc[...] = jnp.maximum(max_acc[...], pmax)

    def main_tile():
        commit(*reduce_chunks(n_chunks_main))

    def last_tile():
        psum, pmax = reduce_chunks(n_full_last)
        if rem_last:
            off = n_full_last * 128
            c = x_ref[:, :, off:off + 128].astype(jnp.float32)
            lane = lax.broadcasted_iota(jnp.int32, acc_shape, 2)
            psum = psum + c                    # zero padding: sum unaffected
            pmax = jnp.maximum(pmax, jnp.where(lane < rem_last, c, -jnp.inf))
        commit(psum, pmax)

    last_differs = (n_full_last != n_chunks_main) or (rem_last != 0)
    if hw_steps == 1:
        last_tile()
    elif not last_differs:
        main_tile()
    else:
        @pl.when(k < hw_steps - 1)
        def _main():
            main_tile()

        @pl.when(k == hw_steps - 1)
        def _last():
            last_tile()

    @pl.when(k == hw_steps - 1)
    def _epilogue():
        mean = jnp.sum(sum_acc[...], axis=-1) * (1.0 / hw_true)   # (Bt, C)
        mx = jnp.max(max_acc[...], axis=-1)                       # (Bt, C)
        s = mean + mx
        # convBlock collapsed to one affine map (no activation inside it).
        val = jnp.sum(s * weff_ref[...], axis=-1, keepdims=True)  # (Bt, 1)
        gate = jax.nn.sigmoid(val + 2.0 * beff_ref[...])          # (Bt, 1)
        o_ref[...] = gate.reshape(o_ref.shape).astype(o_ref.dtype)


# ---------------------------------------------------------------------------
# Tiling / wrapper
# ---------------------------------------------------------------------------
def _choose_tiling(B, C, HW, itemsize,
                   per_buf_cap=8 << 20, target_step_bytes=2 << 20):
    """Lane-dense spatial tile + batch fold, sized against a VMEM budget that
    is safe on every generation (double-buffered x stays ~16 MiB max)."""
    hw128 = pl.cdiv(HW, 128) * 128

    # Fold batch rows when a single row is far below the target step size.
    Bt = 1
    row_bytes = max(1, C * hw128 * itemsize)
    if row_bytes < target_step_bytes:
        want = min(B, pl.cdiv(target_step_bytes, row_bytes))
        for d in range(want, 0, -1):
            if B % d == 0 and d * row_bytes <= per_buf_cap:
                Bt = d
                break

    # Spatial tile: as large as the per-buffer budget allows.
    max_tile = max(128, (per_buf_cap // (Bt * C * itemsize)) // 128 * 128)
    tile_hw = min(hw128, max_tile)
    if tile_hw < hw128:
        # Prefer a tile that evenly divides the 128-padded extent (uniform
        # tiles, no special-cased tail) if it costs at most 2x in size.
        n128 = hw128 // 128
        d = tile_hw // 128
        while d > 1 and n128 % d:
            d -= 1
        if d * 128 * 2 >= tile_hw:
            tile_hw = d * 128
    hw_steps = pl.cdiv(HW, tile_hw)
    return Bt, tile_hw, hw_steps


def channel_attention(x, params, *, tile_hw=None, batch_tile=None):
    """x: (B, C, H, W) NCHW, float32 or bfloat16. Returns (B, 1, 1, 1)."""
    B, C, H, W = x.shape
    w1, b1, w2, b2, w3, b3 = params
    mid = w1.shape[0]
    HW = H * W

    auto_bt, auto_tile, _ = _choose_tiling(B, C, HW, x.dtype.itemsize)
    Bt = batch_tile if batch_tile is not None else auto_bt
    tile_hw = tile_hw if tile_hw is not None else auto_tile
    assert B % Bt == 0 and (tile_hw % 128 == 0 or tile_hw == HW)
    hw_steps = pl.cdiv(HW, tile_hw)
    hw_pad = hw_steps * tile_hw

    x_flat = x.reshape(B, C, HW)
    if hw_pad != HW:
        x_flat = jnp.pad(x_flat, ((0, 0), (0, 0), (0, hw_pad - HW)))

    # Collapse convBlock (three back-to-back affine maps on a 1x1 input; the
    # 3x3 conv with padding=1 only sees its centre tap) into w_eff / b_eff.
    f32 = jnp.float32
    W1 = w1[:, :, 0, 0].astype(f32)                 # (mid, C)
    W2 = w2[:, :, 1, 1].astype(f32)                 # (mid, mid) centre tap
    W3 = w3[:, :, 0, 0].astype(f32)                 # (1, mid)
    w_eff = W3 @ W2 @ W1                            # (1, C)
    b_eff = (W3 @ W2 @ b1.astype(f32).reshape(mid, 1)
             + W3 @ b2.astype(f32).reshape(mid, 1)
             + b3.astype(f32).reshape(1, 1))        # (1, 1)

    valid_last = HW - (hw_steps - 1) * tile_hw
    n_full_last = valid_last // 128
    rem_last = valid_last - n_full_last * 128

    kernel = functools.partial(
        channel_attention_kernel,
        hw_true=HW,
        n_chunks_main=tile_hw // 128,
        n_full_last=n_full_last,
        rem_last=rem_last,
        hw_steps=hw_steps,
        unroll=8,
    )

    # Explicit VMEM budget: double-buffered x block + two f32 accumulators
    # + small operands + margin.  Stays below v7x's 64 MiB physical VMEM.
    x_block_bytes = Bt * C * tile_hw * x.dtype.itemsize
    scratch_bytes = 2 * Bt * C * 128 * 4
    vmem_limit = int(2 * x_block_bytes + scratch_bytes + (4 << 20))
    vmem_limit = max(16 << 20, min(vmem_limit, 56 << 20))

    out = pl.pallas_call(
        kernel,
        out_shape=jax.ShapeDtypeStruct((B, 1, 1), x.dtype),
        grid_spec=pltpu.PrefetchScalarGridSpec(
            num_scalar_prefetch=0,
            grid=(B // Bt, hw_steps),               # reduction axis last
            in_specs=[
                pl.BlockSpec((Bt, C, tile_hw), lambda b, k: (b, 0, k)),
                pl.BlockSpec((1, C), lambda b, k: (0, 0)),
                pl.BlockSpec((1, 1), lambda b, k: (0, 0)),
            ],
            out_specs=pl.BlockSpec((Bt, 1, 1), lambda b, k: (b, 0, 0)),
            scratch_shapes=[pltpu.VMEM((Bt, C, 128), jnp.float32),   # sum
                            pltpu.VMEM((Bt, C, 128), jnp.float32)],  # max
        ),
        compiler_params=pltpu.CompilerParams(
            dimension_semantics=("parallel", "arbitrary"),
            vmem_limit_bytes=vmem_limit),
    )(x_flat, w_eff, b_eff)
    return out.reshape(B, 1, 1, 1)


# ---------------------------------------------------------------------------
# Params / reference (PyTorch-equivalent)
# ---------------------------------------------------------------------------
def init_params(key, in_channels):
    """Deterministic PyTorch-style (kaiming-uniform a=sqrt(5)) conv init."""
    mid = math.ceil(in_channels // 16)   # matches the PyTorch module verbatim

    def conv_init(k, out_c, in_c, ksz):
        fan_in = in_c * ksz * ksz
        bound = 1.0 / math.sqrt(fan_in)
        kw, kb = jax.random.split(k)
        w = jax.random.uniform(kw, (out_c, in_c, ksz, ksz), jnp.float32, -bound, bound)
        b = jax.random.uniform(kb, (out_c,), jnp.float32, -bound, bound)
        return w, b

    k1, k2, k3 = jax.random.split(key, 3)
    w1, b1 = conv_init(k1, mid, in_channels, 1)
    w2, b2 = conv_init(k2, mid, mid, 3)
    w3, b3 = conv_init(k3, 1, mid, 1)
    return (w1, b1, w2, b2, w3, b3)


def reference(x, params):
    """Pure-JAX reference matching the PyTorch forward."""
    w1, b1, w2, b2, w3, b3 = params
    B, C, H, W = x.shape
    avg = jnp.mean(x, axis=(-1, -2))                   # (B, C)
    mx = jnp.max(x.reshape(B, C, -1), axis=2)          # (B, C)

    def block(v):
        h = v @ w1[:, :, 0, 0].T + b1
        h = h @ w2[:, :, 1, 1].T + b2
        h = h @ w3[:, :, 0, 0].T + b3
        return h

    return jax.nn.sigmoid(block(avg) + block(mx)).reshape(B, 1, 1, 1)


if __name__ == "__main__":
    key = jax.random.PRNGKey(0)

    def check(B, C, H, W, **kw):
        kx, kp = jax.random.split(jax.random.fold_in(key, H * W + C))
        x = jax.random.normal(kx, (B, C, H, W), jnp.float32)
        params = init_params(kp, C)
        out = jax.block_until_ready(channel_attention(x, params, **kw))
        ref = reference(x, params)
        assert out.shape == (B, 1, 1, 1)
        assert jnp.allclose(out, ref, atol=1e-5, rtol=1e-5), (out, ref)

    # Primary small case.
    check(2, 32, 16, 16)
    # Multi-step spatial grid + ragged tail (accumulator + masking paths).
    check(2, 32, 23, 23, tile_hw=256, batch_tile=1)
    # Larger single tile exercising the bounded-unroll fori_loop path.
    check(2, 32, 47, 47)

    print("KERNEL_OK")
</pallas_src>

<mosaic_0001>
module attributes {stable_mosaic.version = 11 : i64} {
  func.func @channel_attention_kernel(%arg0: i32, %arg1: i32, %arg2: memref<2x32x256xf32, #tpu.memory_space<vmem>>, %arg3: memref<1x32xf32, #tpu.memory_space<vmem>>, %arg4: memref<1x1xf32, #tpu.memory_space<vmem>>, %arg5: memref<2x1x1xf32, #tpu.memory_space<vmem>>, %arg6: memref<2x32x128xf32, #tpu.memory_space<vmem>>, %arg7: memref<2x32x128xf32, #tpu.memory_space<vmem>>) attributes {dimension_semantics = [#tpu.dimension_semantics<parallel>, #tpu.dimension_semantics<arbitrary>], iteration_bounds = array<i64: 1, 1>, scalar_prefetch = 0 : i64, scratch_operands = 2 : i64, tpu.core_type = #tpu.core_type<tc>, window_params = [{transform_indices = @transform_0, window_bounds = array<i64: 2, 32, 256>}, {pipeline_mode = #tpu.pipeline_mode<synchronous>, transform_indices = @transform_1, window_bounds = array<i64: 1, 32>}, {pipeline_mode = #tpu.pipeline_mode<synchronous>, transform_indices = @transform_2, window_bounds = array<i64: 1, 1>}, {transform_indices = @transform_3, window_bounds = array<i64: 2, 1, 1>}]} {
    %c0_i32 = arith.constant 0 : i32
    %0 = arith.cmpi eq, %arg1, %c0_i32 : i32
    %1 = arith.extui %0 : i1 to i32
    %c0_i32_0 = arith.constant 0 : i32
    %2 = arith.cmpi ne, %1, %c0_i32_0 : i32
    scf.if %2 {
      %cst_20 = arith.constant 0.000000e+00 : f32
      %24 = vector.broadcast %cst_20 : f32 to vector<2x32x128xf32>
      %c0_21 = arith.constant 0 : index
      %c0_22 = arith.constant 0 : index
      %c0_23 = arith.constant 0 : index
      %25 = vector.load %arg6[%c0_21, %c0_22, %c0_23] : memref<2x32x128xf32, #tpu.memory_space<vmem>>, vector<2x32x128xf32>
      tpu.vector_store %arg6[%c0_21, %c0_22, %c0_23], %24 {strides = array<i32>} : memref<2x32x128xf32, #tpu.memory_space<vmem>>, vector<2x32x128xf32>,
      %cst_24 = arith.constant 0xFF800000 : f32
      %26 = vector.broadcast %cst_24 : f32 to vector<2x32x128xf32>
      %c0_25 = arith.constant 0 : index
      %c0_26 = arith.constant 0 : index
      %c0_27 = arith.constant 0 : index
      %27 = vector.load %arg7[%c0_25, %c0_26, %c0_27] : memref<2x32x128xf32, #tpu.memory_space<vmem>>, vector<2x32x128xf32>
      tpu.vector_store %arg7[%c0_25, %c0_26, %c0_27], %26 {strides = array<i32>} : memref<2x32x128xf32, #tpu.memory_space<vmem>>, vector<2x32x128xf32>,
    } else {
    }
    %cst = arith.constant 0.000000e+00 : f32
    %3 = vector.broadcast %cst : f32 to vector<2x32x128xf32>
    %cst_1 = arith.constant 0xFF800000 : f32
    %4 = vector.broadcast %cst_1 : f32 to vector<2x32x128xf32>
    %c0_i32_2 = arith.constant 0 : i32
    %5 = tpu.assume_multiple %c0_i32_2, 128 : i32
    %c0 = arith.constant 0 : index
    %c0_3 = arith.constant 0 : index
    %6 = arith.index_cast %5 : i32 to index
    %7 = vector.load %arg2[%c0, %c0_3, %6] : memref<2x32x256xf32, #tpu.memory_space<vmem>>, vector<2x32x128xf32>
    %8 = arith.addf %3, %7 : vector<2x32x128xf32>
    %9 = arith.maximumf %4, %7 : vector<2x32x128xf32>
    %c128_i32 = arith.constant 128 : i32
    %10 = tpu.assume_multiple %c128_i32, 128 : i32
    %c0_4 = arith.constant 0 : index
    %c0_5 = arith.constant 0 : index
    %11 = arith.index_cast %10 : i32 to index
    %12 = vector.load %arg2[%c0_4, %c0_5, %11] : memref<2x32x256xf32, #tpu.memory_space<vmem>>, vector<2x32x128xf32>
    %13 = arith.addf %8, %12 : vector<2x32x128xf32>
    %14 = arith.maximumf %9, %12 : vector<2x32x128xf32>
    %c0_6 = arith.constant 0 : index
    %c0_7 = arith.constant 0 : index
    %c0_8 = arith.constant 0 : index
    %15 = vector.load %arg6[%c0_6, %c0_7, %c0_8] : memref<2x32x128xf32, #tpu.memory_space<vmem>>, vector<2x32x128xf32>
    %16 = arith.addf %15, %13 : vector<2x32x128xf32>
    %c0_9 = arith.constant 0 : index
    %c0_10 = arith.constant 0 : index
    %c0_11 = arith.constant 0 : index
    %17 = vector.load %arg6[%c0_9, %c0_10, %c0_11] : memref<2x32x128xf32, #tpu.memory_space<vmem>>, vector<2x32x128xf32>
    tpu.vector_store %arg6[%c0_9, %c0_10, %c0_11], %16 {strides = array<i32>} : memref<2x32x128xf32, #tpu.memory_space<vmem>>, vector<2x32x128xf32>,
    %c0_12 = arith.constant 0 : index
    %c0_13 = arith.constant 0 : index
    %c0_14 = arith.constant 0 : index
    %18 = vector.load %arg7[%c0_12, %c0_13, %c0_14] : memref<2x32x128xf32, #tpu.memory_space<vmem>>, vector<2x32x128xf32>
    %19 = arith.maximumf %18, %14 : vector<2x32x128xf32>
    %c0_15 = arith.constant 0 : index
    %c0_16 = arith.constant 0 : index
    %c0_17 = arith.constant 0 : index
    %20 = vector.load %arg7[%c0_15, %c0_16, %c0_17] : memref<2x32x128xf32, #tpu.memory_space<vmem>>, vector<2x32x128xf32>
    tpu.vector_store %arg7[%c0_15, %c0_16, %c0_17], %19 {strides = array<i32>} : memref<2x32x128xf32, #tpu.memory_space<vmem>>, vector<2x32x128xf32>,
    %c0_i32_18 = arith.constant 0 : i32
    %21 = arith.cmpi eq, %arg1, %c0_i32_18 : i32
    %22 = arith.extui %21 : i1 to i32
    %c0_i32_19 = arith.constant 0 : i32
    %23 = arith.cmpi ne, %22, %c0_i32_19 : i32
    scf.if %23 {
      %c0_20 = arith.constant 0 : index
      %c0_21 = arith.constant 0 : index
      %c0_22 = arith.constant 0 : index
      %24 = vector.load %arg6[%c0_20, %c0_21, %c0_22] : memref<2x32x128xf32, #tpu.memory_space<vmem>>, vector<2x32x128xf32>
      %cst_23 = arith.constant dense<0.000000e+00> : vector<2x32xf32>
      %25 = vector.multi_reduction <add>, %24, %cst_23 [2] : vector<2x32x128xf32> to vector<2x32xf32>
      %cst_24 = arith.constant 3.906250e-03 : f32
      %26 = vector.broadcast %cst_24 : f32 to vector<2x32xf32>
      %27 = arith.mulf %25, %26 : vector<2x32xf32>
      %c0_25 = arith.constant 0 : index
      %c0_26 = arith.constant 0 : index
      %c0_27 = arith.constant 0 : index
      %28 = vector.load %arg7[%c0_25, %c0_26, %c0_27] : memref<2x32x128xf32, #tpu.memory_space<vmem>>, vector<2x32x128xf32>
      %cst_28 = arith.constant dense<0xFF800000> : vector<2x32xf32>
      %29 = vector.multi_reduction <maximumf>, %28, %cst_28 [2] : vector<2x32x128xf32> to vector<2x32xf32>
      %30 = arith.addf %27, %29 : vector<2x32xf32>
      %c0_29 = arith.constant 0 : index
      %c0_30 = arith.constant 0 : index
      %31 = vector.load %arg3[%c0_29, %c0_30] : memref<1x32xf32, #tpu.memory_space<vmem>>, vector<1x32xf32>
      %32 = vector.broadcast %31 : vector<1x32xf32> to vector<2x32xf32>
      %33 = arith.mulf %30, %32 : vector<2x32xf32>
      %cst_31 = arith.constant dense<0.000000e+00> : vector<2xf32>
      %34 = vector.multi_reduction <add>, %33, %cst_31 [1] : vector<2x32xf32> to vector<2xf32>
      %35 = vector.shape_cast %34 : vector<2xf32> to vector<2x1xf32>
      %c0_32 = arith.constant 0 : index
      %c0_33 = arith.constant 0 : index
      %36 = vector.load %arg4[%c0_32, %c0_33] : memref<1x1xf32, #tpu.memory_space<vmem>>, vector<1x1xf32>
      %cst_34 = arith.constant 2.000000e+00 : f32
      %37 = vector.broadcast %cst_34 : f32 to vector<1x1xf32>
      %38 = arith.mulf %37, %36 : vector<1x1xf32>
      %39 = vector.broadcast %38 : vector<1x1xf32> to vector<2x1xf32>
      %40 = arith.addf %35, %39 : vector<2x1xf32>
      %41 = arith.negf %40 : vector<2x1xf32>
      %42 = math.exp %41 : vector<2x1xf32>
      %cst_35 = arith.constant 1.000000e+00 : f32
      %43 = vector.broadcast %cst_35 : f32 to vector<2x1xf32>
      %44 = arith.addf %43, %42 : vector<2x1xf32>
      %45 = arith.divf %43, %44 : vector<2x1xf32>
      %46 = vector.shape_cast %45 : vector<2x1xf32> to vector<2x1x1xf32>
      %c0_36 = arith.constant 0 : index
      %c0_37 = arith.constant 0 : index
      %c0_38 = arith.constant 0 : index
      %47 = vector.load %arg5[%c0_36, %c0_37, %c0_38] : memref<2x1x1xf32, #tpu.memory_space<vmem>>, vector<2x1x1xf32>
      tpu.vector_store %arg5[%c0_36, %c0_37, %c0_38], %46 {strides = array<i32>} : memref<2x1x1xf32, #tpu.memory_space<vmem>>, vector<2x1x1xf32>,
    } else {
    }
    return
  }
  func.func @transform_0(%arg0: i32, %arg1: i32) -> (i32, i32, i32) {
    %c0_i32 = arith.constant 0 : i32
    %c0_i32_0 = arith.constant 0 : i32
    return %arg0, %c0_i32, %arg1 : i32, i32, i32
  }
  func.func @transform_1(%arg0: i32, %arg1: i32) -> (i32, i32) {
    %c0_i32 = arith.constant 0 : i32
    %c0_i32_0 = arith.constant 0 : i32
    %c0_i32_1 = arith.constant 0 : i32
    return %c0_i32, %c0_i32_0 : i32, i32
  }
  func.func @transform_2(%arg0: i32, %arg1: i32) -> (i32, i32) {
    %c0_i32 = arith.constant 0 : i32
    %c0_i32_0 = arith.constant 0 : i32
    %c0_i32_1 = arith.constant 0 : i32
    return %c0_i32, %c0_i32_0 : i32, i32
  }
  func.func @transform_3(%arg0: i32, %arg1: i32) -> (i32, i32, i32) {
    %c0_i32 = arith.constant 0 : i32
    %c0_i32_0 = arith.constant 0 : i32
    %c0_i32_1 = arith.constant 0 : i32
    return %arg0, %c0_i32, %c0_i32_0 : i32, i32, i32
  }
}

</mosaic_0001>

<llo_original>
// kernel: tpu_custom_call.1
$region0: #{tpu_custom_call.1}
  #allocation0 [shape = 'u32[]', space=smem, size = 0x4, offset = 0x4, fixed_abs, tag = 'smem constant byte address 0x4 - core index']
  #allocation1 [shape = 'u32[72,128]{1,0:T(1,128)}', space=vmem, size = 0x9000, scoped, tag = 'internal scratch']
  #allocation2 [shape = 'f32[2,32,128]{2,1,0:T(8,128)}', space=vmem, size = 0x8000, scoped, tag = 'scratch operand']
  #allocation3 [shape = 'f32[2,32,128]{2,1,0:T(8,128)}', space=vmem, size = 0x8000, scoped, tag = 'scratch operand']
  #allocation4 [shape = 'f32[1,1]{1,0:T(1,128)S(1)}', space=vmem, size = 0x200, scoped, tag = 'scoped memory for tpu_custom_call.1']
  %s0 = inlined_call_operand.hbm [shape: f32[2,32,256], index: 0, kind: input, shape index: {}]
  %s1 = inlined_call_operand.vmem [shape: f32[1,32], index: 1, kind: input, shape index: {}]
  %s2 = inlined_call_operand.<no memory space> [shape: f32[1,1], index: 2, kind: input, shape index: {}]
  %s3 = inlined_call_operand.vmem [shape: f32[2,1,1], index: 3, kind: output, shape index: {}]
  %s4 = sld [smem:[#allocation0]]
  $region34: #{tpu_custom_call.1} parent=0
    _
  %s6 = ssub.s32 1, %s4
  %s7 = scalar_select 0, %s6, %s4
  %v8 = vstv %s2
  %9 = vst [vmem:[#allocation4] sm:$0x1] %v8
  $region1: #{tpu_custom_call.1} parent=0
    #allocation5 [shape = 'u8[65536]{0}', space=vmem, size = 0x10000, scoped, tag = 'input window, operand 0, single buffered']
    #allocation6 [shape = 's32[1]{0}', space=sflag, size = 0x4, scoped, tag = 'scoped memory for tpu_custom_call.1']
    %10 = vsyncpa [#allocation6], 0
    // Predicated region
    $region2: #{tpu_custom_call.1} parent=1 // pred_check
      _
    $region3: #{tpu_custom_call.1} parent=1 // pred_check_branch
      %12 = sbr.rel (0) target = $region5
    $region4: #{tpu_custom_call.1} parent=1 // pred_region
      %14 = vsyncadd [#allocation6], 0
      %s15 = sshll.u32 %s0, 4
      %s16 = int_to_ptr.hbm [resolvable:$true] %s15
      %s17 = sshll.u32 [#allocation5], 4
      %s18 = int_to_ptr.vmem [resolvable:$true] %s17
      %23 = dma.hbm_to_vmem [thread:$0]  %s16, 2048, %s18, [#allocation6], 256, 256, 16
    $region5: #{tpu_custom_call.1} parent=1 // pred_fallthru
      _
    // Predicated region
    $region6: #{tpu_custom_call.1} parent=1 // pred_check
      _
    $region7: #{tpu_custom_call.1} parent=1 // pred_check_branch
      %25 = sbr.rel (0) target = $region9
    $region8: #{tpu_custom_call.1} parent=1 // pred_region
      _
    $region9: #{tpu_custom_call.1} parent=1 // pred_fallthru
      _
    // Predicated region
    $region10: #{tpu_custom_call.1} parent=1 // pred_check
      _
    $region11: #{tpu_custom_call.1} parent=1 // pred_check_branch
      %27 = sbr.rel (0) target = $region13
    $region12: #{tpu_custom_call.1} parent=1 // pred_region
      _
    $region13: #{tpu_custom_call.1} parent=1 // pred_fallthru
      _
    // Predicated region
    $region14: #{tpu_custom_call.1} parent=1 // pred_check
      _
    $region15: #{tpu_custom_call.1} parent=1 // pred_check_branch
      %29 = sbr.rel (0) target = $region17
    $region16: #{tpu_custom_call.1} parent=1 // pred_region
      %31 = dma.done [#allocation6], 2048
    $region17: #{tpu_custom_call.1} parent=1 // pred_fallthru
      _
    %p32 = scmp.eq.s32.totalorder 0, 0
    // Predicated region
    $region18: #{tpu_custom_call.1} parent=1 // pred_check
      %p33 = pneg %p32
    $region19: #{tpu_custom_call.1} parent=1 // pred_check_branch
      %35 = sbr.rel (%p33) target = $region21
    $region20: #{tpu_custom_call.1} parent=1 // pred_region
      %36 = vst [vmem:[#allocation2] sm:$0xff] 0.0
      %37 = vst [vmem:[#allocation2 + $0x8] sm:$0xff] 0.0
      %38 = vst [vmem:[#allocation2 + $0x10] sm:$0xff] 0.0
      %39 = vst [vmem:[#allocation2 + $0x18] sm:$0xff] 0.0
      %40 = vst [vmem:[#allocation2 + $0x20] sm:$0xff] 0.0
      %41 = vst [vmem:[#allocation2 + $0x28] sm:$0xff] 0.0
      %42 = vst [vmem:[#allocation2 + $0x30] sm:$0xff] 0.0
      %43 = vst [vmem:[#allocation2 + $0x38] sm:$0xff] 0.0
      %44 = vst [vmem:[#allocation3] sm:$0xff] -inf
      %45 = vst [vmem:[#allocation3 + $0x8] sm:$0xff] -inf
      %46 = vst [vmem:[#allocation3 + $0x10] sm:$0xff] -inf
      %47 = vst [vmem:[#allocation3 + $0x18] sm:$0xff] -inf
      %48 = vst [vmem:[#allocation3 + $0x20] sm:$0xff] -inf
      %49 = vst [vmem:[#allocation3 + $0x28] sm:$0xff] -inf
      %50 = vst [vmem:[#allocation3 + $0x30] sm:$0xff] -inf
      %51 = vst [vmem:[#allocation3 + $0x38] sm:$0xff] -inf
    $region21: #{tpu_custom_call.1} parent=1 // pred_fallthru
      _
    %v52 = vld [vmem:[#allocation5] sm:$0xff]
    %v53 = vld [vmem:[#allocation5 + $0x10] sm:$0xff]
    %v54 = vld [vmem:[#allocation5 + $0x20] sm:$0xff]
    %v55 = vld [vmem:[#allocation5 + $0x30] sm:$0xff]
    %v56 = vld [vmem:[#allocation5 + $0x40] sm:$0xff]
    %v57 = vld [vmem:[#allocation5 + $0x50] sm:$0xff]
    %v58 = vld [vmem:[#allocation5 + $0x60] sm:$0xff]
    %v59 = vld [vmem:[#allocation5 + $0x70] sm:$0xff]
    %v60 = vadd.f32 %v52, 0.0
    %v61 = vadd.f32 %v53, 0.0
    %v62 = vadd.f32 %v54, 0.0
    %v63 = vadd.f32 %v55, 0.0
    %v64 = vadd.f32 %v56, 0.0
    %v65 = vadd.f32 %v57, 0.0
    %v66 = vadd.f32 %v58, 0.0
    %v67 = vadd.f32 %v59, 0.0
    %s68 = scalar_lea.vmem [#allocation5], 8
    %v69 = vld [vmem:[%s68] sm:$0xff]
    %v70 = vld [vmem:[%s68 + $0x10] sm:$0xff]
    %v71 = vld [vmem:[%s68 + $0x20] sm:$0xff]
    %v72 = vld [vmem:[%s68 + $0x30] sm:$0xff]
    %v73 = vld [vmem:[%s68 + $0x40] sm:$0xff]
    %v74 = vld [vmem:[%s68 + $0x50] sm:$0xff]
    %v75 = vld [vmem:[%s68 + $0x60] sm:$0xff]
    %v76 = vld [vmem:[%s68 + $0x70] sm:$0xff]
    %v77 = vadd.f32 %v60, %v69
    %v78 = vadd.f32 %v61, %v70
    %v79 = vadd.f32 %v62, %v71
    %v80 = vadd.f32 %v63, %v72
    %v81 = vadd.f32 %v64, %v73
    %v82 = vadd.f32 %v65, %v74
    %v83 = vadd.f32 %v66, %v75
    %v84 = vadd.f32 %v67, %v76
    %v85 = vmax.f32 %v52, %v69
    %v86 = vmax.f32 %v53, %v70
    %v87 = vmax.f32 %v54, %v71
    %v88 = vmax.f32 %v55, %v72
    %v89 = vmax.f32 %v56, %v73
    %v90 = vmax.f32 %v57, %v74
    %v91 = vmax.f32 %v58, %v75
    %v92 = vmax.f32 %v59, %v76
    %v93 = vld [vmem:[#allocation2] sm:$0xff]
    %v94 = vld [vmem:[#allocation2 + $0x8] sm:$0xff]
    %v95 = vld [vmem:[#allocation2 + $0x10] sm:$0xff]
    %v96 = vld [vmem:[#allocation2 + $0x18] sm:$0xff]
    %v97 = vld [vmem:[#allocation2 + $0x20] sm:$0xff]
    %v98 = vld [vmem:[#allocation2 + $0x28] sm:$0xff]
    %v99 = vld [vmem:[#allocation2 + $0x30] sm:$0xff]
    %v100 = vld [vmem:[#allocation2 + $0x38] sm:$0xff]
    %v101 = vadd.f32 %v93, %v77
    %v102 = vadd.f32 %v94, %v78
    %v103 = vadd.f32 %v95, %v79
    %v104 = vadd.f32 %v96, %v80
    %v105 = vadd.f32 %v97, %v81
    %v106 = vadd.f32 %v98, %v82
    %v107 = vadd.f32 %v99, %v83
    %v108 = vadd.f32 %v100, %v84
    %109 = vst [vmem:[#allocation2] sm:$0xff] %v101
    %110 = vst [vmem:[#allocation2 + $0x8] sm:$0xff] %v102
    %111 = vst [vmem:[#allocation2 + $0x10] sm:$0xff] %v103
    %112 = vst [vmem:[#allocation2 + $0x18] sm:$0xff] %v104
    %113 = vst [vmem:[#allocation2 + $0x20] sm:$0xff] %v105
    %114 = vst [vmem:[#allocation2 + $0x28] sm:$0xff] %v106
    %115 = vst [vmem:[#allocation2 + $0x30] sm:$0xff] %v107
    %116 = vst [vmem:[#allocation2 + $0x38] sm:$0xff] %v108
    %v117 = vld [vmem:[#allocation3] sm:$0xff]
    %v118 = vld [vmem:[#allocation3 + $0x8] sm:$0xff]
    %v119 = vld [vmem:[#allocation3 + $0x10] sm:$0xff]
    %v120 = vld [vmem:[#allocation3 + $0x18] sm:$0xff]
    %v121 = vld [vmem:[#allocation3 + $0x20] sm:$0xff]
    %v122 = vld [vmem:[#allocation3 + $0x28] sm:$0xff]
    %v123 = vld [vmem:[#allocation3 + $0x30] sm:$0xff]
    %v124 = vld [vmem:[#allocation3 + $0x38] sm:$0xff]
    %v125 = vmax.f32 %v117, %v85
    %v126 = vmax.f32 %v118, %v86
    %v127 = vmax.f32 %v119, %v87
    %v128 = vmax.f32 %v120, %v88
    %v129 = vmax.f32 %v121, %v89
    %v130 = vmax.f32 %v122, %v90
    %v131 = vmax.f32 %v123, %v91
    %v132 = vmax.f32 %v124, %v92
    %133 = vst [vmem:[#allocation3] sm:$0xff] %v125
    %134 = vst [vmem:[#allocation3 + $0x8] sm:$0xff] %v126
    %135 = vst [vmem:[#allocation3 + $0x10] sm:$0xff] %v127
    %136 = vst [vmem:[#allocation3 + $0x18] sm:$0xff] %v128
    %137 = vst [vmem:[#allocation3 + $0x20] sm:$0xff] %v129
    %138 = vst [vmem:[#allocation3 + $0x28] sm:$0xff] %v130
    %139 = vst [vmem:[#allocation3 + $0x30] sm:$0xff] %v131
    %140 = vst [vmem:[#allocation3 + $0x38] sm:$0xff] %v132
    // Predicated region
    $region22: #{tpu_custom_call.1} parent=1 // pred_check
      %p141 = pneg %p32
    $region23: #{tpu_custom_call.1} parent=1 // pred_check_branch
      %143 = sbr.rel (%p141) target = $region25
    $region24: #{tpu_custom_call.1} parent=1 // pred_region
      %v144 = vld [vmem:[#allocation2] sm:$0xff]
      %v145 = vld [vmem:[#allocation2 + $0x8] sm:$0xff]
      %v146 = vld [vmem:[#allocation2 + $0x10] sm:$0xff]
      %v147 = vld [vmem:[#allocation2 + $0x18] sm:$0xff]
      %v148 = vld [vmem:[#allocation2 + $0x20] sm:$0xff]
      %v149 = vld [vmem:[#allocation2 + $0x28] sm:$0xff]
      %v150 = vld [vmem:[#allocation2 + $0x30] sm:$0xff]
      %v151 = vld [vmem:[#allocation2 + $0x38] sm:$0xff]
      %152 = vadd.xlane.f32.xlu0 %v144
      %v153 = vpop.xlane.xlu0 %152
      %154 = vadd.xlane.f32.xlu0 %v145
      %v155 = vpop.xlane.xlu0 %154
      %156 = vadd.xlane.f32.xlu0 %v146
      %v157 = vpop.xlane.xlu0 %156
      %158 = vadd.xlane.f32.xlu0 %v147
      %v159 = vpop.xlane.xlu0 %158
      %160 = vadd.xlane.f32.xlu0 %v148
      %v161 = vpop.xlane.xlu0 %160
      %162 = vadd.xlane.f32.xlu0 %v149
      %v163 = vpop.xlane.xlu0 %162
      %164 = vadd.xlane.f32.xlu0 %v150
      %v165 = vpop.xlane.xlu0 %164
      %166 = vadd.xlane.f32.xlu0 %v151
      %v167 = vpop.xlane.xlu0 %166
      %v168 = vmul.f32 %v153, 0.00390625
      %v169 = vmul.f32 %v155, 0.00390625
      %v170 = vmul.f32 %v157, 0.00390625
      %v171 = vmul.f32 %v159, 0.00390625
      %v172 = vmul.f32 %v161, 0.00390625
      %v173 = vmul.f32 %v163, 0.00390625
      %v174 = vmul.f32 %v165, 0.00390625
      %v175 = vmul.f32 %v167, 0.00390625
      %v176 = vld [vmem:[#allocation3] sm:$0xff]
      %v177 = vld [vmem:[#allocation3 + $0x8] sm:$0xff]
      %v178 = vld [vmem:[#allocation3 + $0x10] sm:$0xff]
      %v179 = vld [vmem:[#allocation3 + $0x18] sm:$0xff]
      %v180 = vld [vmem:[#allocation3 + $0x20] sm:$0xff]
      %v181 = vld [vmem:[#allocation3 + $0x28] sm:$0xff]
      %v182 = vld [vmem:[#allocation3 + $0x30] sm:$0xff]
      %v183 = vld [vmem:[#allocation3 + $0x38] sm:$0xff]
      %184 = vmax.xlane.f32.xlu0 %v176
      %v185 = vpop.xlane.xlu0 %184
      %186 = vmax.xlane.f32.xlu0 %v177
      %v187 = vpop.xlane.xlu0 %186
      %188 = vmax.xlane.f32.xlu0 %v178
      %v189 = vpop.xlane.xlu0 %188
      %190 = vmax.xlane.f32.xlu0 %v179
      %v191 = vpop.xlane.xlu0 %190
      %192 = vmax.xlane.f32.xlu0 %v180
      %v193 = vpop.xlane.xlu0 %192
      %194 = vmax.xlane.f32.xlu0 %v181
      %v195 = vpop.xlane.xlu0 %194
      %196 = vmax.xlane.f32.xlu0 %v182
      %v197 = vpop.xlane.xlu0 %196
      %198 = vmax.xlane.f32.xlu0 %v183
      %v199 = vpop.xlane.xlu0 %198
      %v200 = vadd.f32 %v168, %v185
      %v201 = vadd.f32 %v169, %v187
      %v202 = vadd.f32 %v170, %v189
      %v203 = vadd.f32 %v171, %v191
      %v204 = vadd.f32 %v172, %v193
      %v205 = vadd.f32 %v173, %v195
      %v206 = vadd.f32 %v174, %v197
      %v207 = vadd.f32 %v175, %v199
      %v208 = vld [vmem:[%s1] sm:$0x1]
      %v210 = vperm.slane %v208, 0
      %v211 = vlaneseq
      %v212 = vshrl.u32 %v211, 7
      %214 = vset.pattern.permute.xlu0 %v212
      %215 = vperm.xlu0 %214, %v210
      %v216 = vpop.permute.xlu0 %215
      %v217 = vlaneseq
      %v218 = vshrl.u32 %v217, 7
      %v219 = vadd.s32 %v218, 8
      %220 = vset.pattern.permute.xlu0 %v219
      %221 = vperm.xlu0 %220, %v210
      %v222 = vpop.permute.xlu0 %221
      %v223 = vlaneseq
      %v224 = vshrl.u32 %v223, 7
      %v225 = vadd.s32 %v224, 16
      %226 = vset.pattern.permute.xlu0 %v225
      %227 = vperm.xlu0 %226, %v210
      %v228 = vpop.permute.xlu0 %227
      %v229 = vlaneseq
      %v230 = vshrl.u32 %v229, 7
      %v231 = vadd.s32 %v230, 24
      %232 = vset.pattern.permute.xlu0 %v231
      %233 = vperm.xlu0 %232, %v210
      %v234 = vpop.permute.xlu0 %233
      %v239 = vmul.f32 %v200, %v216
      %v240 = vmul.f32 %v201, %v222
      %v241 = vmul.f32 %v202, %v228
      %v242 = vmul.f32 %v203, %v234
      %v243 = vmul.f32 %v204, %v216
      %v244 = vmul.f32 %v205, %v222
      %v245 = vmul.f32 %v206, %v228
      %v246 = vmul.f32 %v207, %v234
      %255 = vset.pattern.permute.xlu0 0
      %256 = vperm.xlu0 %255, %v239
      %v257 = vpop.permute.xlu0 %256
      %258 = vset.pattern.permute.xlu0 0
      %259 = vperm.xlu0 %258, %v240
      %v260 = vpop.permute.xlu0 %259
      %261 = vset.pattern.permute.xlu0 0
      %262 = vperm.xlu0 %261, %v241
      %v263 = vpop.permute.xlu0 %262
      %264 = vset.pattern.permute.xlu0 0
      %265 = vperm.xlu0 %264, %v242
      %v266 = vpop.permute.xlu0 %265
      %267 = vset.pattern.permute.xlu0 0
      %268 = vperm.xlu0 %267, %v243
      %v269 = vpop.permute.xlu0 %268
      %270 = vset.pattern.permute.xlu0 0
      %271 = vperm.xlu0 %270, %v244
      %v272 = vpop.permute.xlu0 %271
      %273 = vset.pattern.permute.xlu0 0
      %274 = vperm.xlu0 %273, %v245
      %v275 = vpop.permute.xlu0 %274
      %276 = vset.pattern.permute.xlu0 0
      %277 = vperm.xlu0 %276, %v246
      %v278 = vpop.permute.xlu0 %277
      %v279 = vlaneseq
      %v280 = vand.u32 %v279, 127
      %v281 = vperm.slane %v257, %v280
      %v282 = vadd.s32 %v280, 4294967288
      %v283 = vperm.slane %v260, %v282
      %vm284 = vcmask 130112
      %v285 = vsel %vm284, %v283, %v281
      %v286 = vadd.s32 %v280, 4294967280
      %v287 = vperm.slane %v263, %v286
      %vm288 = vcmask 195712
      %v289 = vsel %vm288, %v287, %v285
      %v290 = vadd.s32 %v280, 4294967272
      %v291 = vperm.slane %v266, %v290
      %vm292 = vcmask 261312
      %v293 = vsel %vm292, %v291, %v289
      %v294 = vperm.slane %v269, %v280
      %v295 = vperm.slane %v272, %v282
      %v296 = vsel %vm284, %v295, %v294
      %v297 = vperm.slane %v275, %v286
      %v298 = vsel %vm288, %v297, %v296
      %v299 = vperm.slane %v278, %v290
      %v300 = vsel %vm292, %v299, %v298
      %vm301 = vcmask 1041409
      %v302 = vsel %vm301, %v300, %v293
      %vm304 = vcmask 254976
      %v305 = vsel %vm304, %v302, 0.0
      %306 = vadd.xlane.f32.xlu0 %v305
      %v307 = vpop.xlane.xlu0 %306
      %v308 = vld [vmem:[#allocation4] sm:$0x1]
      %v309 = vmul.f32 %v308, 2.0
      %v311 = vperm.slane %v309, 0
      %v313 = vadd.f32 %v307, %v311
      %v314 = vxor.u32 %v313, 2147483648
      %v315 = vmul.f32 %v314, 1.442695
      %v316 = vpow.pop %v315
      %v317 = vadd.f32 %v316, 1.0
      %v318 = vrcp.pop %v317
      %v319 = vmul.f32 %v317, %v318
      %v320 = vsub.f32 1.0, %v319
      %v321 = vmul.f32 %v318, %v320
      %v322 = vadd.f32 %v318, %v321
      %vm323 = vweird.f32 %v317
      %vm324 = vweird.f32 %v318
      %vm325 = vmor %vm323, %vm324
      %v326 = vsel %vm325, %v318, %v322
      %v327 = vand.u32 2147483647, %v317
      %vm328 = vcmp.eq.f32.partialorder %v327, 8.507059e+37
      %v329 = vand.u32 %v317, 2147483648
      %v330 = vor.u32 1.1754944e-38, %v329
      %v331 = vsel %vm328, %v330, %v326
      %v332 = vmul.f32 1.0, %v331
      %v334 = vrot.slane %v332, 1
      %vm336 = vcmask 0
      %337 = vst.msk [vmem:[%s3] sm:$0x1] %vm336, %v332
      %338 = vst.msk [vmem:[%s3 + $0x1] sm:$0x1] %vm336, %v334
    $region25: #{tpu_custom_call.1} parent=1 // pred_fallthru
      _
    // Predicated region
    $region26: #{tpu_custom_call.1} parent=1 // pred_check
      _
    $region27: #{tpu_custom_call.1} parent=1 // pred_check_branch
      %340 = sbr.rel (0) target = $region29
    $region28: #{tpu_custom_call.1} parent=1 // pred_region
      _
    $region29: #{tpu_custom_call.1} parent=1 // pred_fallthru
      _
    // Predicated region
    $region30: #{tpu_custom_call.1} parent=1 // pred_check
      _
    $region31: #{tpu_custom_call.1} parent=1 // pred_check_branch
      %342 = sbr.rel (0) target = $region33
    $region32: #{tpu_custom_call.1} parent=1 // pred_region
      _
    $region33: #{tpu_custom_call.1} parent=1 // pred_fallthru
      _
    %343 = vsyncpa [#allocation6], 1

</llo_original>
